<compile_context>
chip_gen: v6e
topology: v6e:2x2x1
jax: 0.10.0
libtpu: 0.0.40
codegen_flags: <defaults>
</compile_context>

<pallas_src>
import functools

import jax
import jax.numpy as jnp
from jax import lax
from jax.experimental import pallas as pl
from jax.experimental.pallas import tpu as pltpu

EPS = 1e-12
_LANES = 128
_SUBLANES = 8
_TILE = _LANES * _SUBLANES          # 1024 elements = one (8,128) f32 tile
# Rows (of 128 lanes) per input block: 8192 rows = 4 MiB per f32 input block
# (2 MiB for bf16).  2 inputs x 2 pipeline buffers + f32 temporaries stay well
# inside the 40 MiB VMEM limit (v5e/v6e: 128 MiB physical, v7x: 64 MiB).
_BLOCK_ROWS = 8192
_VMEM_LIMIT_BYTES = 40 * 1024 * 1024


def _round_up(x, m):
    return ((x + m - 1) // m) * m


def _kl_kernel(in_ref, tgt_ref, out_ref, *, eps, total_rows, block_rows, ragged):
    """in/tgt blocks: (1, S, 128); out block: (1, 8, 128) per-chunk partials."""
    # Upcast once in-kernel; all math stays f32 (v5e has no bf16 VPU/EUP).
    x = in_ref[...].astype(jnp.float32)
    t = tgt_ref[...].astype(jnp.float32)
    # log-difference form: same two EUP pushes as log((t+eps)/(x+eps)) but no
    # full-precision f32 divide (shorter VPU dependency chain).
    loss = t * (jnp.log(t + eps) - jnp.log(x + eps))

    if ragged:
        # The last block along the row axis overruns the array; its
        # out-of-bounds rows hold unspecified data and MUST be masked.
        k = pl.program_id(1)
        row = lax.broadcasted_iota(jnp.int32, loss.shape, dimension=1)
        limit = total_rows - k * block_rows          # >= block_rows except last
        loss = jnp.where(row < limit, loss, 0.0)

    # Accumulate into one full (8,128) vreg: pure VPU adds across sub-tiles
    # (tile-aligned reshape); the final 8-sublane + 128-lane reduce happens
    # once per chunk in the wrapper, not per grid step.
    partial = jnp.sum(
        loss.reshape(block_rows // _SUBLANES, _SUBLANES, _LANES), axis=0)
    out_ref[...] = partial[None]


def kl_divergence_loss(input_, target, *, reduction="sum", eps=EPS,
                       batch_mean=True, block_rows=_BLOCK_ROWS):
    """JAX/Pallas port of KLdivergence.forward.

    input_/target: (B, C, *spatial).  Returns () if batch_mean else (B,).
    """
    assert input_.shape == target.shape
    B = input_.shape[0]
    spatial_size = 1
    for d in input_.shape[2:]:
        spatial_size *= d

    # Flatten all non-batch dims, keeping the native dtype (no wrapper upcast).
    x = input_.reshape(B, -1)
    t = target.reshape(B, -1)
    N = x.shape[1]
    itemsize = jnp.dtype(x.dtype).itemsize

    # Materialize a padded copy ONLY when the lane-dense (B, L, 128) reshape
    # genuinely requires it (N % 128 != 0) or the per-batch row is smaller
    # than one (8,128) tile.  Zero padding is loss-neutral because
    # 0 * log((0+eps)/(0+eps)) == 0, which requires eps > 0.
    if N % _LANES != 0 or N < _TILE:
        assert eps > 0, "zero-padding the ragged tail requires eps > 0"
        N_pad = _round_up(max(N, _TILE), _TILE)
        pad = N_pad - N
        x = jnp.pad(x, ((0, 0), (0, pad)))
        t = jnp.pad(t, ((0, 0), (0, pad)))
        N = N_pad

    L = N // _LANES                     # rows of 128 lanes per batch element

    # Balanced chunking over the unpadded L (never round L up to a multiple of
    # the block).  The last block may be ragged: Pallas only DMAs the
    # in-bounds rows and the kernel masks the rest, so waste is compute-only.
    n_target = pl.cdiv(L, block_rows)
    S = _round_up(pl.cdiv(L, n_target), _SUBLANES)
    S = min(S, (L // _SUBLANES) * _SUBLANES)     # block never exceeds the array
    n_chunks = pl.cdiv(L, S)
    ragged = (n_chunks * S != L)

    x3 = x.reshape(B, L, _LANES)
    t3 = t.reshape(B, L, _LANES)

    cost = pl.CostEstimate(
        flops=5 * B * L * _LANES,
        transcendentals=2 * B * L * _LANES,
        bytes_accessed=2 * B * L * _LANES * itemsize
                       + B * n_chunks * _SUBLANES * _LANES * 4,
    )

    partials = pl.pallas_call(
        functools.partial(_kl_kernel, eps=eps, total_rows=L, block_rows=S,
                          ragged=ragged),
        out_shape=jax.ShapeDtypeStruct((B, n_chunks * _SUBLANES, _LANES),
                                       jnp.float32),
        grid_spec=pltpu.PrefetchScalarGridSpec(
            num_scalar_prefetch=0,
            grid=(B, n_chunks),
            in_specs=[
                pl.BlockSpec((1, S, _LANES), lambda b, k: (b, k, 0)),
                pl.BlockSpec((1, S, _LANES), lambda b, k: (b, k, 0)),
            ],
            out_specs=pl.BlockSpec((1, _SUBLANES, _LANES),
                                   lambda b, k: (b, k, 0)),
        ),
        compiler_params=pltpu.CompilerParams(
            # Each grid point owns its own output block -> both axes are
            # independent; full 2-TensorCore utilization on v7x even at B=1.
            dimension_semantics=("parallel", "parallel"),
            vmem_limit_bytes=_VMEM_LIMIT_BYTES,
        ),
        cost_estimate=cost,
    )(x3, t3)

    # Tiny epilogue: per-batch total = sum over chunk partials, sublanes, lanes.
    loss = jnp.sum(partials, axis=(1, 2))        # (B,)

    if reduction == "sum":
        pass
    elif reduction == "mean":
        # Kernel summed over C and spatial; spatial mean == / prod(spatial).
        loss = loss / float(spatial_size)
    else:
        raise NotImplementedError(f"Not support {reduction} for reduction")

    if batch_mean:
        loss = jnp.mean(loss, axis=0)
    return loss


def _reference(input_, target, *, reduction="sum", eps=EPS, batch_mean=True):
    # Pure-JAX reference mirroring the PyTorch module (computed in f32).
    x = jnp.moveaxis(input_, 1, 0).astype(jnp.float32)   # (C, B, *)
    t = jnp.moveaxis(target, 1, 0).astype(jnp.float32)
    loss = t * jnp.log((t + eps) / (x + eps))
    loss = loss.sum(axis=0)                               # (B, *)
    dims = tuple(range(1, loss.ndim))
    if reduction == "sum":
        loss = loss.sum(axis=dims)
    else:
        loss = loss.mean(axis=dims)
    if batch_mean:
        loss = loss.mean(axis=0)
    return loss


if __name__ == "__main__":
    key = jax.random.PRNGKey(0)
    k1, k2, k3, k4, k5, k6 = jax.random.split(key, 6)

    # --- Main case: f32, N = C*H*W multiple of 1024 (pad-free path) ----------
    B, C, H, W = 2, 4, 16, 16
    input_ = jax.nn.softmax(jax.random.normal(k1, (B, C, H, W)), axis=1)
    target = jax.nn.softmax(jax.random.normal(k2, (B, C, H, W)), axis=1)

    out = jax.block_until_ready(
        kl_divergence_loss(input_, target, reduction="sum", batch_mean=True))
    ref = _reference(input_, target, reduction="sum", batch_mean=True)
    assert jnp.allclose(out, ref, rtol=1e-5, atol=1e-5), (out, ref)

    out_b = jax.block_until_ready(
        kl_divergence_loss(input_, target, reduction="sum", batch_mean=False))
    ref_b = _reference(input_, target, reduction="sum", batch_mean=False)
    assert jnp.allclose(out_b, ref_b, rtol=1e-5, atol=1e-5), (out_b, ref_b)

    out_m = jax.block_until_ready(
        kl_divergence_loss(input_, target, reduction="mean", batch_mean=False))
    ref_m = _reference(input_, target, reduction="mean", batch_mean=False)
    assert jnp.allclose(out_m, ref_m, rtol=1e-5, atol=1e-5), (out_m, ref_m)

    # --- bf16 passthrough (no wrapper up-cast; f32 math in-kernel) -----------
    in_bf = input_.astype(jnp.bfloat16)
    tg_bf = target.astype(jnp.bfloat16)
    out_bf = jax.block_until_ready(
        kl_divergence_loss(in_bf, tg_bf, reduction="sum", batch_mean=True))
    ref_bf = _reference(in_bf, tg_bf, reduction="sum", batch_mean=True)
    assert jnp.allclose(out_bf, ref_bf, rtol=1e-4, atol=1e-4), (out_bf, ref_bf)

    # --- N % 128 != 0: exercises the (only remaining) zero-pad path ----------
    B2, C2, H2, W2 = 2, 3, 5, 7
    in2 = jax.nn.softmax(jax.random.normal(k3, (B2, C2, H2, W2)), axis=1)
    tg2 = jax.nn.softmax(jax.random.normal(k4, (B2, C2, H2, W2)), axis=1)
    out2 = jax.block_until_ready(
        kl_divergence_loss(in2, tg2, reduction="sum", batch_mean=False))
    ref2 = _reference(in2, tg2, reduction="sum", batch_mean=False)
    assert jnp.allclose(out2, ref2, rtol=1e-5, atol=1e-5), (out2, ref2)

    # --- N % 128 == 0 but rows not divisible by the block: exercises the
    #     pad-free ragged last block + in-kernel row masking (L=17, S=16). ----
    B3, C3, H3, W3 = 2, 8, 16, 17
    in3 = jax.nn.softmax(jax.random.normal(k5, (B3, C3, H3, W3)), axis=1)
    tg3 = jax.nn.softmax(jax.random.normal(k6, (B3, C3, H3, W3)), axis=1)
    out3 = jax.block_until_ready(
        kl_divergence_loss(in3, tg3, reduction="sum", batch_mean=False))
    ref3 = _reference(in3, tg3, reduction="sum", batch_mean=False)
    assert jnp.allclose(out3, ref3, rtol=1e-5, atol=1e-5), (out3, ref3)

    print("KERNEL_OK")
</pallas_src>

<mosaic_0001>
module attributes {stable_mosaic.version = 11 : i64} {
  func.func @_kl_kernel(%arg0: i32, %arg1: i32, %arg2: memref<1x8x128xf32, #tpu.memory_space<vmem>>, %arg3: memref<1x8x128xf32, #tpu.memory_space<vmem>>, %arg4: memref<1x8x128xf32, #tpu.memory_space<vmem>>) attributes {dimension_semantics = [#tpu.dimension_semantics<parallel>, #tpu.dimension_semantics<parallel>], iteration_bounds = array<i64: 2, 1>, scalar_prefetch = 0 : i64, scratch_operands = 0 : i64, tpu.core_type = #tpu.core_type<tc>, window_params = [{transform_indices = @transform_0, window_bounds = array<i64: 1, 8, 128>}, {transform_indices = @transform_1, window_bounds = array<i64: 1, 8, 128>}, {transform_indices = @transform_2, window_bounds = array<i64: 1, 8, 128>}]} {
    %c0 = arith.constant 0 : index
    %c0_0 = arith.constant 0 : index
    %c0_1 = arith.constant 0 : index
    %0 = vector.load %arg2[%c0, %c0_0, %c0_1] : memref<1x8x128xf32, #tpu.memory_space<vmem>>, vector<1x8x128xf32>
    %c0_2 = arith.constant 0 : index
    %c0_3 = arith.constant 0 : index
    %c0_4 = arith.constant 0 : index
    %1 = vector.load %arg3[%c0_2, %c0_3, %c0_4] : memref<1x8x128xf32, #tpu.memory_space<vmem>>, vector<1x8x128xf32>
    %cst = arith.constant 9.99999996E-13 : f32
    %2 = vector.broadcast %cst : f32 to vector<1x8x128xf32>
    %3 = arith.addf %1, %2 : vector<1x8x128xf32>
    %4 = math.log %3 : vector<1x8x128xf32>
    %cst_5 = arith.constant 9.99999996E-13 : f32
    %5 = vector.broadcast %cst_5 : f32 to vector<1x8x128xf32>
    %6 = arith.addf %0, %5 : vector<1x8x128xf32>
    %7 = math.log %6 : vector<1x8x128xf32>
    %8 = arith.subf %4, %7 : vector<1x8x128xf32>
    %9 = arith.mulf %1, %8 : vector<1x8x128xf32>
    %cst_6 = arith.constant dense<0.000000e+00> : vector<8x128xf32>
    %10 = vector.multi_reduction <add>, %9, %cst_6 [0] : vector<1x8x128xf32> to vector<8x128xf32>
    %11 = vector.shape_cast %10 : vector<8x128xf32> to vector<1x8x128xf32>
    %c0_7 = arith.constant 0 : index
    %c0_8 = arith.constant 0 : index
    %c0_9 = arith.constant 0 : index
    %12 = vector.load %arg4[%c0_7, %c0_8, %c0_9] : memref<1x8x128xf32, #tpu.memory_space<vmem>>, vector<1x8x128xf32>
    tpu.vector_store %arg4[%c0_7, %c0_8, %c0_9], %11 {strides = array<i32>} : memref<1x8x128xf32, #tpu.memory_space<vmem>>, vector<1x8x128xf32>,
    return
  }
  func.func @transform_0(%arg0: i32, %arg1: i32) -> (i32, i32, i32) {
    %c0_i32 = arith.constant 0 : i32
    %c0_i32_0 = arith.constant 0 : i32
    return %arg0, %arg1, %c0_i32 : i32, i32, i32
  }
  func.func @transform_1(%arg0: i32, %arg1: i32) -> (i32, i32, i32) {
    %c0_i32 = arith.constant 0 : i32
    %c0_i32_0 = arith.constant 0 : i32
    return %arg0, %arg1, %c0_i32 : i32, i32, i32
  }
  func.func @transform_2(%arg0: i32, %arg1: i32) -> (i32, i32, i32) {
    %c0_i32 = arith.constant 0 : i32
    %c0_i32_0 = arith.constant 0 : i32
    return %arg0, %arg1, %c0_i32 : i32, i32, i32
  }
}

</mosaic_0001>

<llo_original>
// kernel: tpu_custom_call.1
$region0: #{tpu_custom_call.1}
  #allocation0 [shape = 'u32[]', space=smem, size = 0x4, offset = 0x4, fixed_abs, tag = 'smem constant byte address 0x4 - core index']
  #allocation1 [shape = 'u32[144,128]{1,0:T(1,128)}', space=vmem, size = 0x12000, scoped, tag = 'internal scratch']
  %s0 = inlined_call_operand.hbm [shape: f32[2,8,128], index: 0, kind: input, shape index: {}]
  %s1 = inlined_call_operand.hbm [shape: f32[2,8,128], index: 1, kind: input, shape index: {}]
  %s2 = inlined_call_operand.hbm [shape: f32[2,8,128], index: 2, kind: output, shape index: {}]
  %s3 = sld [smem:[#allocation0]]
  $region49: #{tpu_custom_call.1} parent=0
    _
  %s5 = ssub.s32 1, %s3
  %s6 = scalar_select 0, %s5, %s3
  $region1: #{tpu_custom_call.1} parent=0
    #allocation2 [shape = 'u8[8192]{0}', space=vmem, size = 0x2000, scoped, tag = 'input window, operand 0']
    #allocation3 [shape = 's32[2]{0}', space=sflag, size = 0x8, scoped, tag = 'scoped memory for tpu_custom_call.1']
    #allocation4 [shape = 's32[2]{0}', space=sflag, size = 0x8, scoped, tag = 'scoped memory for tpu_custom_call.1']
    #allocation5 [shape = 'u8[8192]{0}', space=vmem, size = 0x2000, scoped, tag = 'input window, operand 1']
    #allocation6 [shape = 's32[2]{0}', space=sflag, size = 0x8, scoped, tag = 'scoped memory for tpu_custom_call.1']
    #allocation7 [shape = 'u8[8192]{0}', space=vmem, size = 0x2000, scoped, tag = 'output window, operand 0']
    %7 = vsyncpa [#allocation3], 0
    %s8 = scalar_lea.sflag [#allocation3], 1
    %9 = vsyncpa %s8, 0
    %10 = vsyncpa [#allocation6], 0
    %s11 = scalar_lea.sflag [#allocation6], 1
    %12 = vsyncpa %s11, 0
    %13 = vsyncpa [#allocation4], 0
    %s14 = scalar_lea.sflag [#allocation4], 1
    %15 = vsyncpa %s14, 0
    loop: start=0, step=1, limit=4
    $region2: #{tpu_custom_call.1} parent=1 // loop_pre_header
      _
    $region3: #{tpu_custom_call.1} parent=1 // loop_header
      %s17 = sphi 0, %s21
      %p18 = scmp.ge.s32.totalorder %s17, 4
      %s24 = sphi 0, %s36
      %s25 = sphi 0, %s32
      %s26 = sphi 0, %s24
      %s27 = sphi 0, %s25
      %s28 = sphi 0, %s26
      %s29 = sphi 0, %s27
      %s41 = sphi 0, %s43
      %s44 = sphi 0, %s41
      %s45 = sphi 0, %s44
      %s61 = sphi 0, %s45
      %s69 = sphi 0, %s71
      %s72 = sphi 0, %s69
      %s73 = sphi 0, %s72
      %s89 = sphi 0, %s73
      %s97 = sphi 0, %s99
      %s100 = sphi 0, %s97
      %s101 = sphi 0, %s100
      %s117 = sphi 0, %s101
    $region4: #{tpu_custom_call.1} parent=1 // loop_header_branch
      %20 = sbr.rel (%p18) target = $region8
    $region5: #{tpu_custom_call.1} parent=1 // loop_body
      %s22 = ssub.s32 %s17, 1
      %s23 = ssub.s32 %s17, 2
      %s30 = sadd.s32 1, %s25
      %p31 = scmp.ge.s32.totalorder %s30, 1
      %s32 = scalar_select %p31, 0, %s30
      %s33 = sadd.s32 1, %s24
      %s34 = scalar_select %p31, %s33, %s24
      %p35 = scmp.ge.s32.totalorder %s34, 2
      %s36 = scalar_select %p35, 0, %s34
      %s37 = ssub.s32 %s24, %s36
      %s38 = ssub.s32 %s25, %s32
      %s39 = sor.u32 %s37, %s38
      %p40 = scmp.eq.s32.totalorder %s39, 0
      %s42 = sadd.s32 %s41, 1
      %s43 = scalar_select %p40, %s41, %s42
      %p46 = pneg %p40
      %p47 = scmp.eq.s32.totalorder %s17, 1
      %p48 = por %p46, %p47
      %p49 = scmp.ne.s32.totalorder %s41, %s44
      %p50 = scmp.eq.s32.totalorder %s17, 0
      %p51 = por %p49, %p50
      %p52 = scmp.ne.s32.totalorder %s41, %s44
      %p53 = scmp.eq.s32.totalorder %s22, 1
      %p54 = por %p52, %p53
      %p55 = scmp.ne.s32.totalorder %s44, %s45
      %p56 = scmp.eq.s32.totalorder %s22, 0
      %p57 = por %p55, %p56
      %p58 = scmp.ne.s32.totalorder %s44, %s45
      %p59 = scmp.eq.s32.totalorder %s23, 1
      %p60 = por %p58, %p59
      %p62 = scmp.ne.s32.totalorder %s45, %s61
      %p63 = scmp.eq.s32.totalorder %s23, 0
      %p64 = por %p62, %p63
      %s65 = ssub.s32 %s24, %s36
      %s66 = ssub.s32 %s25, %s32
      %s67 = sor.u32 %s65, %s66
      %p68 = scmp.eq.s32.totalorder %s67, 0
      %s70 = sadd.s32 %s69, 1
      %s71 = scalar_select %p68, %s69, %s70
      %p74 = pneg %p68
      %p75 = scmp.eq.s32.totalorder %s17, 1
      %p76 = por %p74, %p75
      %p77 = scmp.ne.s32.totalorder %s69, %s72
      %p78 = scmp.eq.s32.totalorder %s17, 0
      %p79 = por %p77, %p78
      %p80 = scmp.ne.s32.totalorder %s69, %s72
      %p81 = scmp.eq.s32.totalorder %s22, 1
      %p82 = por %p80, %p81
      %p83 = scmp.ne.s32.totalorder %s72, %s73
      %p84 = scmp.eq.s32.totalorder %s22, 0
      %p85 = por %p83, %p84
      %p86 = scmp.ne.s32.totalorder %s72, %s73
      %p87 = scmp.eq.s32.totalorder %s23, 1
      %p88 = por %p86, %p87
      %p90 = scmp.ne.s32.totalorder %s73, %s89
      %p91 = scmp.eq.s32.totalorder %s23, 0
      %p92 = por %p90, %p91
      %s93 = ssub.s32 %s24, %s36
      %s94 = ssub.s32 %s25, %s32
      %s95 = sor.u32 %s93, %s94
      %p96 = scmp.eq.s32.totalorder %s95, 0
      %s98 = sadd.s32 %s97, 1
      %s99 = scalar_select %p96, %s97, %s98
      %p102 = pneg %p96
      %p103 = scmp.eq.s32.totalorder %s17, 1
      %p104 = por %p102, %p103
      %p105 = scmp.ne.s32.totalorder %s97, %s100
      %p106 = scmp.eq.s32.totalorder %s17, 0
      %p107 = por %p105, %p106
      %p108 = scmp.ne.s32.totalorder %s97, %s100
      %p109 = scmp.eq.s32.totalorder %s22, 1
      %p110 = por %p108, %p109
      %p111 = scmp.ne.s32.totalorder %s100, %s101
      %p112 = scmp.eq.s32.totalorder %s22, 0
      %p113 = por %p111, %p112
      %p114 = scmp.ne.s32.totalorder %s100, %s101
      %p115 = scmp.eq.s32.totalorder %s23, 1
      %p116 = por %p114, %p115
      %p118 = scmp.ne.s32.totalorder %s101, %s117
      %p119 = scmp.eq.s32.totalorder %s23, 0
      %p120 = por %p118, %p119
      %p121 = scmp.le.s32.totalorder 1, %s17
      %p122 = scmp.lt.s32.totalorder %s17, 3
      %p123 = pnand %p121, %p122
      %p124 = pneg %p123
      // Predicated region
      $region9: #{tpu_custom_call.1} parent=5 // pred_check
        _
      $region10: #{tpu_custom_call.1} parent=5 // pred_check_branch
        %126 = sbr.rel (%p123) target = $region12
      $region11: #{tpu_custom_call.1} parent=5 // pred_region
        %s127 = ssub.s32 %s17, 1
      $region12: #{tpu_custom_call.1} parent=5 // pred_fallthru
        _
      %p128 = scmp.lt.s32.totalorder %s17, 2
      // Predicated region
      $region13: #{tpu_custom_call.1} parent=5 // pred_check
        %p129 = pneg %p128
      $region14: #{tpu_custom_call.1} parent=5 // pred_check_branch
        %131 = sbr.rel (%p129) target = $region16
      $region15: #{tpu_custom_call.1} parent=5 // pred_region
        // Predicated region
        $region17: #{tpu_custom_call.1} parent=15 // pred_check
          %p132 = pneg %p51
        $region18: #{tpu_custom_call.1} parent=15 // pred_check_branch
          %134 = sbr.rel (%p132) target = $region20
        $region19: #{tpu_custom_call.1} parent=15 // pred_region
          %s135 = sand.u32 %s41, 1
          %s136 = scalar_lea.sflag [#allocation3], %s135
          %s137 = sand.u32 %s41, 1
          %s138 = smul.addr %s137, 8
          %s139 = scalar_lea.vmem [#allocation2], %s138
          %s141 = ssub.s32 128, 128
          %142 = vsyncadd %s136, %s141
          %s143 = sadd.s32 %s25, %s24
          %s144 = smul.addr %s143, 128
          %s145 = scalar_lea.hbm %s0, %s144
          %s147 = sshll.u32 %s139, 4
          %s148 = int_to_ptr.vmem [resolvable:$true] %s147
          %150 = dma.hbm_to_vmem [thread:$0]  %s145, 128, %s148, %s136
        $region20: #{tpu_custom_call.1} parent=15 // pred_fallthru
          _
        // Predicated region
        $region21: #{tpu_custom_call.1} parent=15 // pred_check
          %p151 = pneg %p79
        $region22: #{tpu_custom_call.1} parent=15 // pred_check_branch
          %153 = sbr.rel (%p151) target = $region24
        $region23: #{tpu_custom_call.1} parent=15 // pred_region
          %s154 = sand.u32 %s69, 1
          %s155 = scalar_lea.sflag [#allocation6], %s154
          %s156 = sand.u32 %s69, 1
          %s157 = smul.addr %s156, 8
          %s158 = scalar_lea.vmem [#allocation5], %s157
          %s160 = ssub.s32 128, 128
          %161 = vsyncadd %s155, %s160
          %s162 = sadd.s32 %s25, %s24
          %s163 = smul.addr %s162, 128
          %s164 = scalar_lea.hbm %s1, %s163
          %s166 = sshll.u32 %s158, 4
          %s167 = int_to_ptr.vmem [resolvable:$true] %s166
          %169 = dma.hbm_to_vmem [thread:$0]  %s164, 128, %s167, %s155
        $region24: #{tpu_custom_call.1} parent=15 // pred_fallthru
          _
      $region16: #{tpu_custom_call.1} parent=5 // pred_fallthru
        _
      %p170 = scmp.le.s32.totalorder 1, %s17
      %p171 = scmp.lt.s32.totalorder %s17, 3
      %p172 = pnand %p170, %p171
      %p173 = pneg %p172
      // Predicated region
      $region25: #{tpu_custom_call.1} parent=5 // pred_check
        _
      $region26: #{tpu_custom_call.1} parent=5 // pred_check_branch
        %175 = sbr.rel (%p172) target = $region28
      $region27: #{tpu_custom_call.1} parent=5 // pred_region
        %s176 = ssub.s32 %s17, 1
        %s177 = sand.u32 %s44, 1
        %s178 = scalar_lea.sflag [#allocation3], %s177
        %s179 = sand.u32 %s44, 1
        %s180 = smul.addr %s179, 8
        %s181 = scalar_lea.vmem [#allocation2], %s180
        // Predicated region
        $region29: #{tpu_custom_call.1} parent=27 // pred_check
          %p182 = pneg %p57
        $region30: #{tpu_custom_call.1} parent=27 // pred_check_branch
          %184 = sbr.rel (%p182) target = $region32
        $region31: #{tpu_custom_call.1} parent=27 // pred_region
          %185 = dma.done %s178, 128
        $region32: #{tpu_custom_call.1} parent=27 // pred_fallthru
          _
        %s186 = sand.u32 %s72, 1
        %s187 = scalar_lea.sflag [#allocation6], %s186
        %s188 = sand.u32 %s72, 1
        %s189 = smul.addr %s188, 8
        %s190 = scalar_lea.vmem [#allocation5], %s189
        // Predicated region
        $region33: #{tpu_custom_call.1} parent=27 // pred_check
          %p191 = pneg %p85
        $region34: #{tpu_custom_call.1} parent=27 // pred_check_branch
          %193 = sbr.rel (%p191) target = $region36
        $region35: #{tpu_custom_call.1} parent=27 // pred_region
          %194 = dma.done %s187, 128
        $region36: #{tpu_custom_call.1} parent=27 // pred_fallthru
          _
        %s195 = sand.u32 %s44, 1
        %s196 = scalar_lea.sflag [#allocation3], %s195
        %s197 = sand.u32 %s44, 1
        %s198 = smul.addr %s197, 8
        %s199 = scalar_lea.vmem [#allocation2], %s198
        %p200 = pneg %p57
        %p201 = pneg %p54
        %s202 = sand.u32 %s72, 1
        %s203 = scalar_lea.sflag [#allocation6], %s202
        %s204 = sand.u32 %s72, 1
        %s205 = smul.addr %s204, 8
        %s206 = scalar_lea.vmem [#allocation5], %s205
        %p207 = pneg %p85
        %p208 = pneg %p82
        %p209 = pneg %p113
        %p210 = pneg %p110
        %s211 = sand.u32 %s100, 1
        %s212 = scalar_lea.sflag [#allocation4], %s211
        %s213 = sand.u32 %s100, 1
        %s214 = smul.addr %s213, 8
        %s215 = scalar_lea.vmem [#allocation7], %s214
        %v216 = vld [vmem:[%s181] sm:$0xff]
        %v217 = vld [vmem:[%s190] sm:$0xff]
        %v218 = vadd.f32 %v217, 1e-12
        %v219 = vlog2.pop %v218
        %v220 = vmul.f32 %v219, 0.6931472
        %v221 = vadd.f32 %v216, 1e-12
        %v222 = vlog2.pop %v221
        %v223 = vmul.f32 %v222, 0.6931472
        %v224 = vsub.f32 %v220, %v223
        %v225 = vmul.f32 %v217, %v224
        %v226 = vadd.f32 %v225, 0.0
        %227 = vst [vmem:[%s215] sm:$0xff] %v226
        %s228 = sand.u32 %s100, 1
        %s229 = scalar_lea.sflag [#allocation4], %s228
        %s230 = sand.u32 %s100, 1
        %s231 = smul.addr %s230, 8
        %s232 = scalar_lea.vmem [#allocation7], %s231
        // Predicated region
        $region37: #{tpu_custom_call.1} parent=27 // pred_check
          %p233 = pneg %p110
        $region38: #{tpu_custom_call.1} parent=27 // pred_check_branch
          %235 = sbr.rel (%p233) target = $region40
        $region39: #{tpu_custom_call.1} parent=27 // pred_region
          %s237 = ssub.s32 128, 128
          %238 = vsyncadd %s229, %s237
          %s239 = sadd.s32 %s27, %s26
          %s240 = smul.addr %s239, 128
          %s241 = scalar_lea.hbm %s2, %s240
          %s243 = sshll.u32 %s232, 4
          %s244 = int_to_ptr.vmem [resolvable:$true] %s243
          %246 = dma.vmem_to_hbm [thread:$0]  %s244, 128, %s241, %s229
        $region40: #{tpu_custom_call.1} parent=27 // pred_fallthru
          _
      $region28: #{tpu_custom_call.1} parent=5 // pred_fallthru
        _
      %p247 = scmp.le.s32.totalorder 2, %s17
      // Predicated region
      $region41: #{tpu_custom_call.1} parent=5 // pred_check
        %p248 = pneg %p247
      $region42: #{tpu_custom_call.1} parent=5 // pred_check_branch
        %250 = sbr.rel (%p248) target = $region44
      $region43: #{tpu_custom_call.1} parent=5 // pred_region
        %s251 = ssub.s32 %s17, 2
        // Predicated region
        $region45: #{tpu_custom_call.1} parent=43 // pred_check
          %p252 = pneg %p116
        $region46: #{tpu_custom_call.1} parent=43 // pred_check_branch
          %254 = sbr.rel (%p252) target = $region48
        $region47: #{tpu_custom_call.1} parent=43 // pred_region
          %s255 = sand.u32 %s101, 1
          %s256 = scalar_lea.sflag [#allocation4], %s255
          %s257 = sand.u32 %s101, 1
          %s258 = smul.addr %s257, 8
          %s259 = scalar_lea.vmem [#allocation7], %s258
          %260 = dma.done %s256, 128
        $region48: #{tpu_custom_call.1} parent=43 // pred_fallthru
          _
      $region44: #{tpu_custom_call.1} parent=5 // pred_fallthru
        _
    $region6: #{tpu_custom_call.1} parent=1 // loop_footer
      %s21 = sadd.s32 1, %s17
    $region7: #{tpu_custom_call.1} parent=1 // loop_footer_branch
      %16 = sbr.rel target = $region3
    $region8: #{tpu_custom_call.1} parent=1 // loop_exit
      _
    %261 = vsyncpa [#allocation3], 1
    %s262 = scalar_lea.sflag [#allocation3], 1
    %263 = vsyncpa %s262, 1
    %264 = vsyncpa [#allocation6], 1
    %s265 = scalar_lea.sflag [#allocation6], 1
    %266 = vsyncpa %s265, 1
    %267 = vsyncpa [#allocation4], 1
    %s268 = scalar_lea.sflag [#allocation4], 1
    %269 = vsyncpa %s268, 1

</llo_original>
